<compile_context>
chip_gen: v7x
topology: tpu7x:2x2x1
jax: 0.10.0
libtpu: 0.0.40
codegen_flags: <defaults>
</compile_context>

<pallas_src>
import math
import functools

import jax
import jax.numpy as jnp
from jax.experimental import pallas as pl
from jax.experimental.pallas import tpu as pltpu


def _round_up(x, m):
    return ((x + m - 1) // m) * m


def _pick_tile(n_pad, preferred):
    """Largest tile <= preferred that divides n_pad.  Prefer 256-multiples
    (clean feed for the 2x256^2 MXU on v6e/v7x), fall back to 128-multiples
    (always succeeds since n_pad % 128 == 0; fine for v5e's 4x128^2 MXU)."""
    t = min(preferred, n_pad)
    for step in (256, 128):
        c = (t // step) * step
        while c >= step:
            if n_pad % c == 0:
                return c
            c -= step
    return 128


def gcn_kernel_resident(colsum_m1_ref, attr_ref, adj_ref, w_ref, b_ref, out_ref,
                        *, inv_out_features, tm, tk):
    # grid = (row blocks i [parallel], reduction blocks k [arbitrary]).
    i = pl.program_id(0)
    k = pl.program_id(1)

    @pl.when(k == 0)
    def _():
        out_ref[...] = jnp.zeros_like(out_ref)

    # Support slab for this k block, recomputed from the VMEM-resident
    # attributes (F_in is tiny; this MXU work hides under the adj DMA).
    attr_k = attr_ref[pl.ds(pl.multiple_of(k * tk, 128), tk), :]
    s_k = jnp.dot(attr_k, w_ref[...], preferred_element_type=jnp.float32)

    # adj is stored narrow (int8) in HBM for binary graphs; upcast on-chip.
    out_ref[...] += jnp.dot(adj_ref[...].astype(jnp.float32), s_k,
                            preferred_element_type=jnp.float32)

    @pl.when(k == pl.num_programs(1) - 1)
    def _():
        attr_i = attr_ref[pl.ds(pl.multiple_of(i * tm, 128), tm), :]
        s_i = jnp.dot(attr_i, w_ref[...], preferred_element_type=jnp.float32)
        # L @ S = (diag(colsum) - adj - I) @ S = (colsum - 1) * S_i - adj @ S
        out_ref[...] = ((colsum_m1_ref[...] * s_i - out_ref[...]) * inv_out_features
                        + b_ref[...]).astype(out_ref.dtype)


def gcn_kernel_streamed(colsum_m1_ref, attr_i_ref, attr_k_ref, adj_ref, w_ref,
                        b_ref, out_ref, *, inv_out_features):
    # Fallback for very large n where the full attribute matrix does not fit
    # comfortably in VMEM: attr blocks are streamed per (i, k) step instead.
    k = pl.program_id(1)

    @pl.when(k == 0)
    def _():
        out_ref[...] = jnp.zeros_like(out_ref)

    s_k = jnp.dot(attr_k_ref[...], w_ref[...], preferred_element_type=jnp.float32)
    out_ref[...] += jnp.dot(adj_ref[...].astype(jnp.float32), s_k,
                            preferred_element_type=jnp.float32)

    @pl.when(k == pl.num_programs(1) - 1)
    def _():
        s_i = jnp.dot(attr_i_ref[...], w_ref[...], preferred_element_type=jnp.float32)
        out_ref[...] = ((colsum_m1_ref[...] * s_i - out_ref[...]) * inv_out_features
                        + b_ref[...]).astype(out_ref.dtype)


# Keep resident attributes comfortably inside v7x's 32 MiB default scoped VMEM
# (conservatively assumes the pipeline may keep 2 buffers of the block).
_ATTR_RESIDENT_BYTES = 4 * 1024 * 1024


def graph_convolution(attributes, adj, weight, bias=None, *,
                      assume_binary_adj=True, attr_resident=None):
    """GCN forward: (diag(sum(adj,0)) - adj - I) @ (attr @ W / F_out) + bias.

    assume_binary_adj: store adj as int8 in HBM (exact only for 0/1 adjacency,
      the standard GCN case; ~4x less HBM traffic on the mem-bound adj stream).
      Pass False for weighted graphs to keep f32 storage.
    attr_resident: keep the full attribute matrix VMEM-resident (removes the
      redundant per-row-block attr stream).  Auto-chosen by size if None.
    """
    attributes = jnp.asarray(attributes, jnp.float32)
    adj = jnp.asarray(adj, jnp.float32)
    weight = jnp.asarray(weight, jnp.float32)
    n, f_in = attributes.shape
    f_out = weight.shape[1]
    assert adj.shape == (n, n)
    if bias is None:
        bias = jnp.zeros((f_out,), jnp.float32)
    bias = jnp.asarray(bias, jnp.float32)

    # ---- pad for (8,128)-aligned tiles and a lane-dense (>=128) output ------
    n_pad = _round_up(n, 128)
    f_out_pad = _round_up(f_out, 128)

    attr_p = jnp.zeros((n_pad, f_in), jnp.float32).at[:n, :].set(attributes)
    adj_p = jnp.zeros((n_pad, n_pad), jnp.float32).at[:n, :n].set(adj)
    w_p = jnp.zeros((f_in, f_out_pad), jnp.float32).at[:, :f_out].set(weight)
    b_p = jnp.zeros((1, f_out_pad), jnp.float32).at[0, :f_out].set(bias)

    # (colsum - 1), precomputed once in f32 (before any adj narrowing), so the
    # tiled kernel never needs a transposed pass over adj.
    colsum_m1 = (jnp.sum(adj_p, axis=0) - 1.0).reshape(n_pad, 1)

    # adj is ~all the HBM traffic: store it narrow when it is binary (exact).
    adj_store = adj_p.astype(jnp.int8) if assume_binary_adj else adj_p

    # Tile sizes: large tiles amortize per-step overhead and hit the DMA
    # roofline plateau; int8 adj tiles (tm, tk) satisfy the (32,128) min tile.
    tm = _pick_tile(n_pad, 512)    # output-row tile
    tk = _pick_tile(n_pad, 1024)   # reduction tile over adj columns
    grid = (n_pad // tm, n_pad // tk)

    if attr_resident is None:
        attr_resident = n_pad * f_in * 4 <= _ATTR_RESIDENT_BYTES

    colsum_spec = pl.BlockSpec((tm, 1), lambda i, k: (i, 0))
    adj_w_b_specs = [
        pl.BlockSpec((tm, tk), lambda i, k: (i, k)),             # adj tile
        pl.BlockSpec((f_in, f_out_pad), lambda i, k: (0, 0)),    # weight (resident)
        pl.BlockSpec((1, f_out_pad), lambda i, k: (0, 0)),       # bias (resident)
    ]

    if attr_resident:
        kernel = functools.partial(gcn_kernel_resident,
                                   inv_out_features=1.0 / float(f_out),
                                   tm=tm, tk=tk)
        in_specs = [colsum_spec,
                    pl.BlockSpec((n_pad, f_in), lambda i, k: (0, 0)),  # attr resident
                    ] + adj_w_b_specs
        operands = (colsum_m1, attr_p, adj_store, w_p, b_p)
    else:
        kernel = functools.partial(gcn_kernel_streamed,
                                   inv_out_features=1.0 / float(f_out))
        in_specs = [colsum_spec,
                    pl.BlockSpec((tm, f_in), lambda i, k: (i, 0)),     # attr row block
                    pl.BlockSpec((tk, f_in), lambda i, k: (k, 0)),     # attr k block
                    ] + adj_w_b_specs
        operands = (colsum_m1, attr_p, attr_p, adj_store, w_p, b_p)

    out_p = pl.pallas_call(
        kernel,
        out_shape=jax.ShapeDtypeStruct((n_pad, f_out_pad), jnp.float32),
        grid_spec=pltpu.PrefetchScalarGridSpec(
            num_scalar_prefetch=0,
            grid=grid,
            in_specs=in_specs,
            # Output block index is constant along k -> stays VMEM-resident and
            # doubles as the f32 accumulator (no scratch needed).
            out_specs=pl.BlockSpec((tm, f_out_pad), lambda i, k: (i, 0)),
        ),
        compiler_params=pltpu.CompilerParams(
            dimension_semantics=("parallel", "arbitrary"),
            vmem_limit_bytes=32 * 1024 * 1024,
        ),
    )(*operands)

    return out_p[:n, :f_out]


def reference(attributes, adj, weight, bias):
    n = adj.shape[0]
    A = adj + jnp.eye(n, dtype=adj.dtype)
    D = jnp.diag(jnp.sum(adj, axis=0))
    L = D - A
    support = (attributes @ weight) / weight.shape[1]
    return L @ support + bias


def _make_inputs(key, n, in_features, out_features):
    k_attr, k_adj, k_w, k_b = jax.random.split(key, 4)
    attributes = jax.random.normal(k_attr, (n, in_features), dtype=jnp.float32)
    adj = (jax.random.uniform(k_adj, (n, n)) > 0.5).astype(jnp.float32)
    # reset_parameters(): uniform(-stdv, stdv), stdv = 1 / sqrt(out_features)
    stdv = 1.0 / math.sqrt(out_features)
    weight = jax.random.uniform(
        k_w, (in_features, out_features), minval=-stdv, maxval=stdv, dtype=jnp.float32
    )
    bias = jax.random.uniform(
        k_b, (out_features,), minval=-stdv, maxval=stdv, dtype=jnp.float32
    )
    return attributes, adj, weight, bias


if __name__ == "__main__":
    key = jax.random.PRNGKey(0)
    k1, k2, k3 = jax.random.split(key, 3)

    # 1) Small shapes matching the module's natural sizes (resident-attr path).
    n, in_features, out_features = 8, 16, 32
    attributes, adj, weight, bias = _make_inputs(k1, n, in_features, out_features)
    out = jax.block_until_ready(graph_convolution(attributes, adj, weight, bias))
    ref = reference(attributes, adj, weight, bias)
    assert out.shape == (n, out_features)
    assert jnp.allclose(out, ref, atol=1e-5, rtol=1e-5), "mismatch vs reference (small)"

    # 2) Larger test: multiple row/reduction tiles, int8 adj, out_ref accumulation.
    n2, f_in2, f_out2 = 640, 16, 32
    a2, adj2, w2, b2 = _make_inputs(k2, n2, f_in2, f_out2)
    out2 = jax.block_until_ready(graph_convolution(a2, adj2, w2, b2))
    ref2 = reference(a2, adj2, w2, b2)
    assert out2.shape == (n2, f_out2)
    assert jnp.allclose(out2, ref2, atol=1e-4, rtol=1e-4), "mismatch vs reference (tiled)"

    # 3) Weighted (non-binary) adj exercises the f32-adj + streamed-attr fallback.
    adj3 = jax.random.uniform(k3, (n2, n2), dtype=jnp.float32)
    out3 = jax.block_until_ready(
        graph_convolution(a2, adj3, w2, b2, assume_binary_adj=False,
                          attr_resident=False))
    ref3 = reference(a2, adj3, w2, b2)
    assert jnp.allclose(out3, ref3, atol=1e-4, rtol=1e-4), "mismatch (weighted/streamed)"

    print("KERNEL_OK")
</pallas_src>

<mosaic_0001>
module attributes {stable_mosaic.version = 11 : i64} {
  func.func @gcn_kernel_resident(%arg0: i32, %arg1: i32, %arg2: memref<128x1xf32, #tpu.memory_space<vmem>>, %arg3: memref<128x16xf32, #tpu.memory_space<vmem>>, %arg4: memref<128x128xi8, #tpu.memory_space<vmem>>, %arg5: memref<16x128xf32, #tpu.memory_space<vmem>>, %arg6: memref<1x128xf32, #tpu.memory_space<vmem>>, %arg7: memref<128x128xf32, #tpu.memory_space<vmem>>) attributes {dimension_semantics = [#tpu.dimension_semantics<parallel>, #tpu.dimension_semantics<arbitrary>], iteration_bounds = array<i64: 1, 1>, scalar_prefetch = 0 : i64, scratch_operands = 0 : i64, tpu.core_type = #tpu.core_type<tc>, window_params = [{transform_indices = @transform_0, window_bounds = array<i64: 128, 1>}, {pipeline_mode = #tpu.pipeline_mode<synchronous>, transform_indices = @transform_1, window_bounds = array<i64: 128, 16>}, {transform_indices = @transform_2, window_bounds = array<i64: 128, 128>}, {pipeline_mode = #tpu.pipeline_mode<synchronous>, transform_indices = @transform_3, window_bounds = array<i64: 16, 128>}, {pipeline_mode = #tpu.pipeline_mode<synchronous>, transform_indices = @transform_4, window_bounds = array<i64: 1, 128>}, {transform_indices = @transform_5, window_bounds = array<i64: 128, 128>}]} {
    %c0_i32 = arith.constant 0 : i32
    %0 = arith.cmpi eq, %arg1, %c0_i32 : i32
    %1 = arith.extui %0 : i1 to i32
    %c0_i32_0 = arith.constant 0 : i32
    %2 = arith.cmpi ne, %1, %c0_i32_0 : i32
    scf.if %2 {
      %cst_12 = arith.constant 0.000000e+00 : f32
      %18 = vector.broadcast %cst_12 : f32 to vector<128x128xf32>
      %c0_13 = arith.constant 0 : index
      %c0_14 = arith.constant 0 : index
      %19 = vector.load %arg7[%c0_13, %c0_14] : memref<128x128xf32, #tpu.memory_space<vmem>>, vector<128x128xf32>
      tpu.vector_store %arg7[%c0_13, %c0_14], %18 {strides = array<i32>} : memref<128x128xf32, #tpu.memory_space<vmem>>, vector<128x128xf32>,
    } else {
    }
    %c128_i32 = arith.constant 128 : i32
    %3 = arith.muli %arg1, %c128_i32 : i32
    %4 = tpu.assume_multiple %3, 128 : i32
    %5 = arith.index_cast %4 : i32 to index
    %c0 = arith.constant 0 : index
    %6 = vector.load %arg3[%5, %c0] : memref<128x16xf32, #tpu.memory_space<vmem>>, vector<128x16xf32>
    %c0_1 = arith.constant 0 : index
    %c0_2 = arith.constant 0 : index
    %7 = vector.load %arg5[%c0_1, %c0_2] : memref<16x128xf32, #tpu.memory_space<vmem>>, vector<16x128xf32>
    %cst = arith.constant dense<0.000000e+00> : vector<128x128xf32>
    %8 = tpu.matmul %6, %7, %cst {dimension_numbers = #tpu.dot_dimension_numbers<[1], [0], [0], [1], [0, 0, 1, 1], [], []>} : vector<128x16xf32>, vector<16x128xf32>, vector<128x128xf32> -> vector<128x128xf32>
    %c0_3 = arith.constant 0 : index
    %c0_4 = arith.constant 0 : index
    %9 = vector.load %arg7[%c0_3, %c0_4] : memref<128x128xf32, #tpu.memory_space<vmem>>, vector<128x128xf32>
    %c0_5 = arith.constant 0 : index
    %c0_6 = arith.constant 0 : index
    %10 = vector.load %arg4[%c0_5, %c0_6] : memref<128x128xi8, #tpu.memory_space<vmem>>, vector<128x128xi8>
    %11 = arith.sitofp %10 : vector<128x128xi8> to vector<128x128xf32>
    %cst_7 = arith.constant dense<0.000000e+00> : vector<128x128xf32>
    %12 = tpu.matmul %11, %8, %cst_7 {dimension_numbers = #tpu.dot_dimension_numbers<[1], [0], [0], [1], [0, 0, 1, 1], [], []>} : vector<128x128xf32>, vector<128x128xf32>, vector<128x128xf32> -> vector<128x128xf32>
    %13 = arith.addf %9, %12 : vector<128x128xf32>
    %c0_8 = arith.constant 0 : index
    %c0_9 = arith.constant 0 : index
    %14 = vector.load %arg7[%c0_8, %c0_9] : memref<128x128xf32, #tpu.memory_space<vmem>>, vector<128x128xf32>
    tpu.vector_store %arg7[%c0_8, %c0_9], %13 {strides = array<i32>} : memref<128x128xf32, #tpu.memory_space<vmem>>, vector<128x128xf32>,
    %c0_i32_10 = arith.constant 0 : i32
    %15 = arith.cmpi eq, %arg1, %c0_i32_10 : i32
    %16 = arith.extui %15 : i1 to i32
    %c0_i32_11 = arith.constant 0 : i32
    %17 = arith.cmpi ne, %16, %c0_i32_11 : i32
    scf.if %17 {
      %c128_i32_12 = arith.constant 128 : i32
      %18 = arith.muli %arg0, %c128_i32_12 : i32
      %19 = tpu.assume_multiple %18, 128 : i32
      %20 = arith.index_cast %19 : i32 to index
      %c0_13 = arith.constant 0 : index
      %21 = vector.load %arg3[%20, %c0_13] : memref<128x16xf32, #tpu.memory_space<vmem>>, vector<128x16xf32>
      %c0_14 = arith.constant 0 : index
      %c0_15 = arith.constant 0 : index
      %22 = vector.load %arg5[%c0_14, %c0_15] : memref<16x128xf32, #tpu.memory_space<vmem>>, vector<16x128xf32>
      %cst_16 = arith.constant dense<0.000000e+00> : vector<128x128xf32>
      %23 = tpu.matmul %21, %22, %cst_16 {dimension_numbers = #tpu.dot_dimension_numbers<[1], [0], [0], [1], [0, 0, 1, 1], [], []>} : vector<128x16xf32>, vector<16x128xf32>, vector<128x128xf32> -> vector<128x128xf32>
      %c0_17 = arith.constant 0 : index
      %c0_18 = arith.constant 0 : index
      %24 = vector.load %arg2[%c0_17, %c0_18] : memref<128x1xf32, #tpu.memory_space<vmem>>, vector<128x1xf32>
      %25 = vector.broadcast %24 : vector<128x1xf32> to vector<128x128xf32>
      %26 = arith.mulf %25, %23 : vector<128x128xf32>
      %c0_19 = arith.constant 0 : index
      %c0_20 = arith.constant 0 : index
      %27 = vector.load %arg7[%c0_19, %c0_20] : memref<128x128xf32, #tpu.memory_space<vmem>>, vector<128x128xf32>
      %28 = arith.subf %26, %27 : vector<128x128xf32>
      %cst_21 = arith.constant 3.125000e-02 : f32
      %29 = vector.broadcast %cst_21 : f32 to vector<128x128xf32>
      %30 = arith.mulf %28, %29 : vector<128x128xf32>
      %c0_22 = arith.constant 0 : index
      %c0_23 = arith.constant 0 : index
      %31 = vector.load %arg6[%c0_22, %c0_23] : memref<1x128xf32, #tpu.memory_space<vmem>>, vector<1x128xf32>
      %32 = vector.broadcast %31 : vector<1x128xf32> to vector<128x128xf32>
      %33 = arith.addf %30, %32 : vector<128x128xf32>
      %c0_24 = arith.constant 0 : index
      %c0_25 = arith.constant 0 : index
      %34 = vector.load %arg7[%c0_24, %c0_25] : memref<128x128xf32, #tpu.memory_space<vmem>>, vector<128x128xf32>
      tpu.vector_store %arg7[%c0_24, %c0_25], %33 {strides = array<i32>} : memref<128x128xf32, #tpu.memory_space<vmem>>, vector<128x128xf32>,
    } else {
    }
    return
  }
  func.func @transform_0(%arg0: i32, %arg1: i32) -> (i32, i32) {
    %c0_i32 = arith.constant 0 : i32
    %c0_i32_0 = arith.constant 0 : i32
    return %arg0, %c0_i32 : i32, i32
  }
  func.func @transform_1(%arg0: i32, %arg1: i32) -> (i32, i32) {
    %c0_i32 = arith.constant 0 : i32
    %c0_i32_0 = arith.constant 0 : i32
    %c0_i32_1 = arith.constant 0 : i32
    return %c0_i32, %c0_i32_0 : i32, i32
  }
  func.func @transform_2(%arg0: i32, %arg1: i32) -> (i32, i32) {
    %c0_i32 = arith.constant 0 : i32
    return %arg0, %arg1 : i32, i32
  }
  func.func @transform_3(%arg0: i32, %arg1: i32) -> (i32, i32) {
    %c0_i32 = arith.constant 0 : i32
    %c0_i32_0 = arith.constant 0 : i32
    %c0_i32_1 = arith.constant 0 : i32
    return %c0_i32, %c0_i32_0 : i32, i32
  }
  func.func @transform_4(%arg0: i32, %arg1: i32) -> (i32, i32) {
    %c0_i32 = arith.constant 0 : i32
    %c0_i32_0 = arith.constant 0 : i32
    %c0_i32_1 = arith.constant 0 : i32
    return %c0_i32, %c0_i32_0 : i32, i32
  }
  func.func @transform_5(%arg0: i32, %arg1: i32) -> (i32, i32) {
    %c0_i32 = arith.constant 0 : i32
    %c0_i32_0 = arith.constant 0 : i32
    return %arg0, %c0_i32 : i32, i32
  }
}

</mosaic_0001>

<llo_original>
// kernel: tpu_custom_call.1
$region0: #{tpu_custom_call.1}
  #allocation0 [shape = 'u32[]', space=smem, size = 0x4, offset = 0x4, fixed_abs, tag = 'smem constant byte address 0x4 - core index']
  #allocation1 [shape = 'u32[144,128]{1,0:T(1,128)}', space=vmem, size = 0x12000, scoped, tag = 'internal scratch']
  %s0 = inlined_call_operand.vmem [shape: f32[128,1], index: 0, kind: input, shape index: {}]
  %s1 = inlined_call_operand.vmem [shape: f32[128,16], index: 1, kind: input, shape index: {}]
  %s2 = inlined_call_operand.vmem [shape: s8[128,128], index: 2, kind: input, shape index: {}]
  %s3 = inlined_call_operand.vmem [shape: f32[16,128], index: 3, kind: input, shape index: {}]
  %s4 = inlined_call_operand.vmem [shape: f32[1,128], index: 4, kind: input, shape index: {}]
  %s5 = inlined_call_operand.hbm [shape: f32[128,128], index: 5, kind: output, shape index: {}]
  %s6 = sld [smem:[#allocation0]]
  $region38: #{tpu_custom_call.1} parent=0
    _
  %s8 = ssub.s32 1, %s6
  %s9 = scalar_select 0, %s8, %s6
  $region1: #{tpu_custom_call.1} parent=0
    #allocation2 [shape = 'u8[65536]{0}', space=vmem, size = 0x10000, scoped, tag = 'output window, operand 0, single buffered']
    #allocation3 [shape = 's32[1]{0}', space=sflag, size = 0x4, scoped, tag = 'scoped memory for tpu_custom_call.1']
    %10 = vsyncpa [#allocation3], 0
    // Predicated region
    $region2: #{tpu_custom_call.1} parent=1 // pred_check
      _
    $region3: #{tpu_custom_call.1} parent=1 // pred_check_branch
      %12 = sbr.rel (0) target = $region5
    $region4: #{tpu_custom_call.1} parent=1 // pred_region
      _
    $region5: #{tpu_custom_call.1} parent=1 // pred_fallthru
      _
    // Predicated region
    $region6: #{tpu_custom_call.1} parent=1 // pred_check
      _
    $region7: #{tpu_custom_call.1} parent=1 // pred_check_branch
      %14 = sbr.rel (0) target = $region9
    $region8: #{tpu_custom_call.1} parent=1 // pred_region
      _
    $region9: #{tpu_custom_call.1} parent=1 // pred_fallthru
      _
    // Predicated region
    $region10: #{tpu_custom_call.1} parent=1 // pred_check
      _
    $region11: #{tpu_custom_call.1} parent=1 // pred_check_branch
      %16 = sbr.rel (0) target = $region13
    $region12: #{tpu_custom_call.1} parent=1 // pred_region
      _
    $region13: #{tpu_custom_call.1} parent=1 // pred_fallthru
      _
    // Predicated region
    $region14: #{tpu_custom_call.1} parent=1 // pred_check
      _
    $region15: #{tpu_custom_call.1} parent=1 // pred_check_branch
      %18 = sbr.rel (0) target = $region17
    $region16: #{tpu_custom_call.1} parent=1 // pred_region
      _
    $region17: #{tpu_custom_call.1} parent=1 // pred_fallthru
      _
    // Predicated region
    $region18: #{tpu_custom_call.1} parent=1 // pred_check
      _
    $region19: #{tpu_custom_call.1} parent=1 // pred_check_branch
      %20 = sbr.rel (0) target = $region21
    $region20: #{tpu_custom_call.1} parent=1 // pred_region
      _
    $region21: #{tpu_custom_call.1} parent=1 // pred_fallthru
      _
    %p21 = scmp.eq.s32.totalorder 0, 0
    // Predicated region
    $region22: #{tpu_custom_call.1} parent=1 // pred_check
      %p22 = pneg %p21
    $region23: #{tpu_custom_call.1} parent=1 // pred_check_branch
      %24 = sbr.rel (%p22) target = $region25
    $region24: #{tpu_custom_call.1} parent=1 // pred_region
      %25 = vst [vmem:[#allocation2] sm:$0xff] 0.0
      %26 = vst [vmem:[#allocation2 + $0x8] sm:$0xff] 0.0
      %27 = vst [vmem:[#allocation2 + $0x10] sm:$0xff] 0.0
      %28 = vst [vmem:[#allocation2 + $0x18] sm:$0xff] 0.0
      %29 = vst [vmem:[#allocation2 + $0x20] sm:$0xff] 0.0
      %30 = vst [vmem:[#allocation2 + $0x28] sm:$0xff] 0.0
      %31 = vst [vmem:[#allocation2 + $0x30] sm:$0xff] 0.0
      %32 = vst [vmem:[#allocation2 + $0x38] sm:$0xff] 0.0
      %33 = vst [vmem:[#allocation2 + $0x40] sm:$0xff] 0.0
      %34 = vst [vmem:[#allocation2 + $0x48] sm:$0xff] 0.0
      %35 = vst [vmem:[#allocation2 + $0x50] sm:$0xff] 0.0
      %36 = vst [vmem:[#allocation2 + $0x58] sm:$0xff] 0.0
      %37 = vst [vmem:[#allocation2 + $0x60] sm:$0xff] 0.0
      %38 = vst [vmem:[#allocation2 + $0x68] sm:$0xff] 0.0
      %39 = vst [vmem:[#allocation2 + $0x70] sm:$0xff] 0.0
      %40 = vst [vmem:[#allocation2 + $0x78] sm:$0xff] 0.0
    $region25: #{tpu_custom_call.1} parent=1 // pred_fallthru
      _
    %s41 = smul.u32 0, 128
    %s42 = scalar_lea.vmem %s1, %s41
    %v43 = vld [vmem:[%s42] sm:$0xff]
    %v44 = vld [vmem:[%s42 + $0x8] sm:$0xff]
    %v45 = vld [vmem:[%s42 + $0x10] sm:$0xff]
    %v46 = vld [vmem:[%s42 + $0x18] sm:$0xff]
    %v47 = vld [vmem:[%s42 + $0x20] sm:$0xff]
    %v48 = vld [vmem:[%s42 + $0x28] sm:$0xff]
    %v49 = vld [vmem:[%s42 + $0x30] sm:$0xff]
    %v50 = vld [vmem:[%s42 + $0x38] sm:$0xff]
    %v51 = vld [vmem:[%s42 + $0x40] sm:$0xff]
    %v52 = vld [vmem:[%s42 + $0x48] sm:$0xff]
    %v53 = vld [vmem:[%s42 + $0x50] sm:$0xff]
    %v54 = vld [vmem:[%s42 + $0x58] sm:$0xff]
    %v55 = vld [vmem:[%s42 + $0x60] sm:$0xff]
    %v56 = vld [vmem:[%s42 + $0x68] sm:$0xff]
    %v57 = vld [vmem:[%s42 + $0x70] sm:$0xff]
    %v58 = vld [vmem:[%s42 + $0x78] sm:$0xff]
    %v59 = vld [vmem:[%s3] sm:$0xff]
    %v60 = vld [vmem:[%s3 + $0x8] sm:$0xff]
    %vm61 = vcmask 130048
    %v63 = vsel %vm61, %v43, 0
    %v66 = vsel %vm61, %v44, 0
    %v69 = vsel %vm61, %v45, 0
    %v72 = vsel %vm61, %v46, 0
    %v75 = vsel %vm61, %v47, 0
    %v78 = vsel %vm61, %v48, 0
    %v81 = vsel %vm61, %v49, 0
    %v84 = vsel %vm61, %v50, 0
    %v87 = vsel %vm61, %v51, 0
    %v90 = vsel %vm61, %v52, 0
    %v93 = vsel %vm61, %v53, 0
    %v96 = vsel %vm61, %v54, 0
    %v99 = vsel %vm61, %v55, 0
    %v102 = vsel %vm61, %v56, 0
    %v105 = vsel %vm61, %v57, 0
    %v108 = vsel %vm61, %v58, 0
    %110 = vmatprep.subr.mxu0 0.0
    %111 = vmatpush1.msra.mxu0 %v59
    %112 = vmatprep.subr.mxu0 0.0
    %113 = vmatpush1.msra.mxu0 %v60
    %114 = vmatprep.subr.mxu0 0.0
    %115 = vmatpush1.msra.mxu0 0.0
    %116 = vmatprep.subr.mxu0 0.0
    %117 = vmatpush1.msra.mxu0 0.0
    %118 = vmatprep.subr.mxu0 0.0
    %119 = vmatpush1.msra.mxu0 0.0
    %120 = vmatprep.subr.mxu0 0.0
    %121 = vmatpush1.msra.mxu0 0.0
    %122 = vmatprep.subr.mxu0 0.0
    %123 = vmatpush1.msra.mxu0 0.0
    %124 = vmatprep.subr.mxu0 0.0
    %125 = vmatpush1.msra.mxu0 0.0
    %126 = vmatprep.subr.mxu0 0.0
    %127 = vmatpush1.msra.mxu0 0.0
    %128 = vmatprep.subr.mxu0 0.0
    %129 = vmatpush1.msra.mxu0 0.0
    %130 = vmatprep.subr.mxu0 0.0
    %131 = vmatpush1.msra.mxu0 0.0
    %132 = vmatprep.subr.mxu0 0.0
    %133 = vmatpush1.msra.mxu0 0.0
    %134 = vmatprep.subr.mxu0 0.0
    %135 = vmatpush1.msra.mxu0 0.0
    %136 = vmatprep.subr.mxu0 0.0
    %137 = vmatpush1.msra.mxu0 0.0
    %138 = vmatprep.subr.mxu0 0.0
    %139 = vmatpush1.msra.mxu0 0.0
    %140 = vmatprep.subr.mxu0 0.0
    %141 = vmatpush1.msra.mxu0 0.0
    %142 = vmatprep.subr.mxu0 0.0
    %143 = vmatpush1.msra.mxu0 0.0
    %144 = vmatprep.subr.mxu0 0.0
    %145 = vmatpush1.msra.mxu0 0.0
    %146 = vmatprep.subr.mxu0 0.0
    %147 = vmatpush1.msra.mxu0 0.0
    %148 = vmatprep.subr.mxu0 0.0
    %149 = vmatpush1.msra.mxu0 0.0
    %150 = vmatprep.subr.mxu0 0.0
    %151 = vmatpush1.msra.mxu0 0.0
    %152 = vmatprep.subr.mxu0 0.0
    %153 = vmatpush1.msra.mxu0 0.0
    %154 = vmatprep.subr.mxu0 0.0
    %155 = vmatpush1.msra.mxu0 0.0
    %156 = vmatprep.subr.mxu0 0.0
    %157 = vmatpush1.msra.mxu0 0.0
    %158 = vmatprep.subr.mxu0 0.0
    %159 = vmatpush1.msra.mxu0 0.0
    %160 = vmatprep.subr.mxu0 0.0
    %161 = vmatpush1.msra.mxu0 0.0
    %162 = vmatprep.subr.mxu0 0.0
    %163 = vmatpush1.msra.mxu0 0.0
    %164 = vmatprep.subr.mxu0 0.0
    %165 = vmatpush1.msra.mxu0 0.0
    %166 = vmatprep.subr.mxu0 0.0
    %167 = vmatpush1.msra.mxu0 0.0
    %168 = vmatprep.subr.mxu0 0.0
    %169 = vmatpush1.msra.mxu0 0.0
    %170 = vmatprep.subr.mxu0 0.0
    %171 = vmatpush1.msra.mxu0 0.0
    %172 = vmatprep.subr.mxu0 0.0
    %173 = vmatpush1.msra.mxu0 0.0
    %174 = vmatprep.mubr.f32.mxu0 0.0
    %175 = vmatmul.mubr.f32.gmra.mrb[0].mxu0 %v63
    %v176 = vpop.f32.mrb[0].mxu0
    %v177 = vadd.f32 0.0, %v176
    %v178 = vpop.f32.mrb[0].mxu0
    %179 = vmatprep.mubr.f32.mxu0 0.0
    %180 = vmatmul.mubr.f32.gmra.mrb[0].mxu0 %v66
    %v181 = vpop.f32.mrb[0].mxu0
    %v182 = vadd.f32 0.0, %v181
    %v183 = vpop.f32.mrb[0].mxu0
    %184 = vmatprep.mubr.f32.mxu0 0.0
    %185 = vmatmul.mubr.f32.gmra.mrb[0].mxu0 %v69
    %v186 = vpop.f32.mrb[0].mxu0
    %v187 = vadd.f32 0.0, %v186
    %v188 = vpop.f32.mrb[0].mxu0
    %189 = vmatprep.mubr.f32.mxu0 0.0
    %190 = vmatmul.mubr.f32.gmra.mrb[0].mxu0 %v72
    %v191 = vpop.f32.mrb[0].mxu0
    %v192 = vadd.f32 0.0, %v191
    %v193 = vpop.f32.mrb[0].mxu0
    %194 = vmatprep.mubr.f32.mxu0 0.0
    %195 = vmatmul.mubr.f32.gmra.mrb[0].mxu0 %v75
    %v196 = vpop.f32.mrb[0].mxu0
    %v197 = vadd.f32 0.0, %v196
    %v198 = vpop.f32.mrb[0].mxu0
    %199 = vmatprep.mubr.f32.mxu0 0.0
    %200 = vmatmul.mubr.f32.gmra.mrb[0].mxu0 %v78
    %v201 = vpop.f32.mrb[0].mxu0
    %v202 = vadd.f32 0.0, %v201
    %v203 = vpop.f32.mrb[0].mxu0
    %204 = vmatprep.mubr.f32.mxu0 0.0
    %205 = vmatmul.mubr.f32.gmra.mrb[0].mxu0 %v81
    %v206 = vpop.f32.mrb[0].mxu0
    %v207 = vadd.f32 0.0, %v206
    %v208 = vpop.f32.mrb[0].mxu0
    %209 = vmatprep.mubr.f32.mxu0 0.0
    %210 = vmatmul.mubr.f32.gmra.mrb[0].mxu0 %v84
    %v211 = vpop.f32.mrb[0].mxu0
    %v212 = vadd.f32 0.0, %v211
    %v213 = vpop.f32.mrb[0].mxu0
    %214 = vmatprep.mubr.f32.mxu0 0.0
    %215 = vmatmul.mubr.f32.gmra.mrb[0].mxu0 %v87
    %v216 = vpop.f32.mrb[0].mxu0
    %v217 = vadd.f32 0.0, %v216
    %v218 = vpop.f32.mrb[0].mxu0
    %219 = vmatprep.mubr.f32.mxu0 0.0
    %220 = vmatmul.mubr.f32.gmra.mrb[0].mxu0 %v90
    %v221 = vpop.f32.mrb[0].mxu0
    %v222 = vadd.f32 0.0, %v221
    %v223 = vpop.f32.mrb[0].mxu0
    %224 = vmatprep.mubr.f32.mxu0 0.0
    %225 = vmatmul.mubr.f32.gmra.mrb[0].mxu0 %v93
    %v226 = vpop.f32.mrb[0].mxu0
    %v227 = vadd.f32 0.0, %v226
    %v228 = vpop.f32.mrb[0].mxu0
    %229 = vmatprep.mubr.f32.mxu0 0.0
    %230 = vmatmul.mubr.f32.gmra.mrb[0].mxu0 %v96
    %v231 = vpop.f32.mrb[0].mxu0
    %v232 = vadd.f32 0.0, %v231
    %v233 = vpop.f32.mrb[0].mxu0
    %234 = vmatprep.mubr.f32.mxu0 0.0
    %235 = vmatmul.mubr.f32.gmra.mrb[0].mxu0 %v99
    %v236 = vpop.f32.mrb[0].mxu0
    %v237 = vadd.f32 0.0, %v236
    %v238 = vpop.f32.mrb[0].mxu0
    %239 = vmatprep.mubr.f32.mxu0 0.0
    %240 = vmatmul.mubr.f32.gmra.mrb[0].mxu0 %v102
    %v241 = vpop.f32.mrb[0].mxu0
    %v242 = vadd.f32 0.0, %v241
    %v243 = vpop.f32.mrb[0].mxu0
    %244 = vmatprep.mubr.f32.mxu0 0.0
    %245 = vmatmul.mubr.f32.gmra.mrb[0].mxu0 %v105
    %v246 = vpop.f32.mrb[0].mxu0
    %v247 = vadd.f32 0.0, %v246
    %v248 = vpop.f32.mrb[0].mxu0
    %249 = vmatprep.mubr.f32.mxu0 0.0
    %250 = vmatmul.mubr.f32.gmra.mrb[0].mxu0 %v108
    %v251 = vpop.f32.mrb[0].mxu0
    %v252 = vadd.f32 0.0, %v251
    %v253 = vpop.f32.mrb[0].mxu0
    %254 = vdwg.mxu0
    %v255 = vld [vmem:[#allocation2] sm:$0xff]
    %v256 = vld [vmem:[#allocation2 + $0x8] sm:$0xff]
    %v257 = vld [vmem:[#allocation2 + $0x10] sm:$0xff]
    %v258 = vld [vmem:[#allocation2 + $0x18] sm:$0xff]
    %v259 = vld [vmem:[#allocation2 + $0x20] sm:$0xff]
    %v260 = vld [vmem:[#allocation2 + $0x28] sm:$0xff]
    %v261 = vld [vmem:[#allocation2 + $0x30] sm:$0xff]
    %v262 = vld [vmem:[#allocation2 + $0x38] sm:$0xff]
    %v263 = vld [vmem:[#allocation2 + $0x40] sm:$0xff]
    %v264 = vld [vmem:[#allocation2 + $0x48] sm:$0xff]
    %v265 = vld [vmem:[#allocation2 + $0x50] sm:$0xff]
    %v266 = vld [vmem:[#allocation2 + $0x58] sm:$0xff]
    %v267 = vld [vmem:[#allocation2 + $0x60] sm:$0xff]
    %v268 = vld [vmem:[#allocation2 + $0x68] sm:$0xff]
    %v269 = vld [vmem:[#allocation2 + $0x70] sm:$0xff]
    %v270 = vld [vmem:[#allocation2 + $0x78] sm:$0xff]
    %v271 = vld [vmem:[%s2] sm:$0xff]
    %v272 = vld [vmem:[%s2 + $0x8] sm:$0xff]
    %v273 = vld [vmem:[%s2 + $0x10] sm:$0xff]
    %v274 = vld [vmem:[%s2 + $0x18] sm:$0xff]
    %v275 = vunpack.c.0.s8 %v271
    %v276 = vunpack.c.1.s8 %v271
    %v277 = vunpack.c.2.s8 %v271
    %v278 = vunpack.c.3.s8 %v271
    %v279 = vunpack.c.0.s8 %v272
    %v280 = vunpack.c.1.s8 %v272
    %v281 = vunpack.c.2.s8 %v272
    %v282 = vunpack.c.3.s8 %v272
    %v283 = vunpack.c.0.s8 %v273
    %v284 = vunpack.c.1.s8 %v273
    %v285 = vunpack.c.2.s8 %v273
    %v286 = vunpack.c.3.s8 %v273
    %v287 = vunpack.c.0.s8 %v274
    %v288 = vunpack.c.1.s8 %v274
    %v289 = vunpack.c.2.s8 %v274
    %v290 = vunpack.c.3.s8 %v274
    %v291 = vcvt.s32.f32 %v275
    %v292 = vcvt.s32.f32 %v276
    %v293 = vcvt.s32.f32 %v277
    %v294 = vcvt.s32.f32 %v278
    %v295 = vcvt.s32.f32 %v279
    %v296 = vcvt.s32.f32 %v280
    %v297 = vcvt.s32.f32 %v281
    %v298 = vcvt.s32.f32 %v282
    %v299 = vcvt.s32.f32 %v283
    %v300 = vcvt.s32.f32 %v284
    %v301 = vcvt.s32.f32 %v285
    %v302 = vcvt.s32.f32 %v286
    %v303 = vcvt.s32.f32 %v287
    %v304 = vcvt.s32.f32 %v288
    %v305 = vcvt.s32.f32 %v289
    %v306 = vcvt.s32.f32 %v290
    %307 = vmatprep.subr.mxu0 0.0
    %308 = vmatpush1.msra.mxu0 %v177
    %309 = vmatprep.subr.mxu0 0.0
    %310 = vmatpush1.msra.mxu0 %v182
    %311 = vmatprep.subr.mxu0 0.0
    %312 = vmatpush1.msra.mxu0 %v187
    %313 = vmatprep.subr.mxu0 0.0
    %314 = vmatpush1.msra.mxu0 %v192
    %315 = vmatprep.subr.mxu0 0.0
    %316 = vmatpush1.msra.mxu0 %v197
    %317 = vmatprep.subr.mxu0 0.0
    %318 = vmatpush1.msra.mxu0 %v202
    %319 = vmatprep.subr.mxu0 0.0
    %320 = vmatpush1.msra.mxu0 %v207
    %321 = vmatprep.subr.mxu0 0.0
    %322 = vmatpush1.msra.mxu0 %v212
    %323 = vmatprep.subr.mxu0 0.0
    %324 = vmatpush1.msra.mxu0 %v217
    %325 = vmatprep.subr.mxu0 0.0
    %326 = vmatpush1.msra.mxu0 %v222
    %327 = vmatprep.subr.mxu0 0.0
    %328 = vmatpush1.msra.mxu0 %v227
    %329 = vmatprep.subr.mxu0 0.0
    %330 = vmatpush1.msra.mxu0 %v232
    %331 = vmatprep.subr.mxu0 0.0
    %332 = vmatpush1.msra.mxu0 %v237
    %333 = vmatprep.subr.mxu0 0.0
    %334 = vmatpush1.msra.mxu0 %v242
    %335 = vmatprep.subr.mxu0 0.0
    %336 = vmatpush1.msra.mxu0 %v247
    %337 = vmatprep.subr.mxu0 0.0
    %338 = vmatpush1.msra.mxu0 %v252
    %339 = vmatprep.subr.mxu0 0.0
    %340 = vmatpush1.msra.mxu0 0.0
    %341 = vmatprep.subr.mxu0 0.0
    %342 = vmatpush1.msra.mxu0 0.0
    %343 = vmatprep.subr.mxu0 0.0
    %344 = vmatpush1.msra.mxu0 0.0
    %345 = vmatprep.subr.mxu0 0.0
    %346 = vmatpush1.msra.mxu0 0.0
    %347 = vmatprep.subr.mxu0 0.0
    %348 = vmatpush1.msra.mxu0 0.0
    %349 = vmatprep.subr.mxu0 0.0
    %350 = vmatpush1.msra.mxu0 0.0
    %351 = vmatprep.subr.mxu0 0.0
    %352 = vmatpush1.msra.mxu0 0.0
    %353 = vmatprep.subr.mxu0 0.0
    %354 = vmatpush1.msra.mxu0 0.0
    %355 = vmatprep.subr.mxu0 0.0
    %356 = vmatpush1.msra.mxu0 0.0
    %357 = vmatprep.subr.mxu0 0.0
    %358 = vmatpush1.msra.mxu0 0.0
    %359 = vmatprep.subr.mxu0 0.0
    %360 = vmatpush1.msra.mxu0 0.0
    %361 = vmatprep.subr.mxu0 0.0
    %362 = vmatpush1.msra.mxu0 0.0
    %363 = vmatprep.subr.mxu0 0.0
    %364 = vmatpush1.msra.mxu0 0.0
    %365 = vmatprep.subr.mxu0 0.0
    %366 = vmatpush1.msra.mxu0 0.0
    %367 = vmatprep.subr.mxu0 0.0
    %368 = vmatpush1.msra.mxu0 0.0
    %369 = vmatprep.subr.mxu0 0.0
    %370 = vmatpush1.msra.mxu0 0.0
    %371 = vmatprep.mubr.f32.mxu0 0.0
    %372 = vmatmul.mubr.f32.gmra.mrb[0].mxu0 %v291
    %v373 = vpop.f32.mrb[0].mxu0
    %v374 = vadd.f32 0.0, %v373
    %v375 = vpop.f32.mrb[0].mxu0
    %376 = vmatprep.mubr.f32.mxu0 0.0
    %377 = vmatmul.mubr.f32.gmra.mrb[0].mxu0 %v292
    %v378 = vpop.f32.mrb[0].mxu0
    %v379 = vadd.f32 0.0, %v378
    %v380 = vpop.f32.mrb[0].mxu0
    %381 = vmatprep.mubr.f32.mxu0 0.0
    %382 = vmatmul.mubr.f32.gmra.mrb[0].mxu0 %v293
    %v383 = vpop.f32.mrb[0].mxu0
    %v384 = vadd.f32 0.0, %v383
    %v385 = vpop.f32.mrb[0].mxu0
    %386 = vmatprep.mubr.f32.mxu0 0.0
    %387 = vmatmul.mubr.f32.gmra.mrb[0].mxu0 %v294
    %v388 = vpop.f32.mrb[0].mxu0
    %v389 = vadd.f32 0.0, %v388
    %v390 = vpop.f32.mrb[0].mxu0
    %391 = vmatprep.mubr.f32.mxu0 0.0
    %392 = vmatmul.mubr.f32.gmra.mrb[0].mxu0 %v295
    %v393 = vpop.f32.mrb[0].mxu0
    %v394 = vadd.f32 0.0, %v393
    %v395 = vpop.f32.mrb[0].mxu0
    %396 = vmatprep.mubr.f32.mxu0 0.0
    %397 = vmatmul.mubr.f32.gmra.mrb[0].mxu0 %v296
    %v398 = vpop.f32.mrb[0].mxu0
    %v399 = vadd.f32 0.0, %v398
    %v400 = vpop.f32.mrb[0].mxu0
    %401 = vmatprep.mubr.f32.mxu0 0.0
    %402 = vmatmul.mubr.f32.gmra.mrb[0].mxu0 %v297
    %v403 = vpop.f32.mrb[0].mxu0
    %v404 = vadd.f32 0.0, %v403
    %v405 = vpop.f32.mrb[0].mxu0
    %406 = vmatprep.mubr.f32.mxu0 0.0
    %407 = vmatmul.mubr.f32.gmra.mrb[0].mxu0 %v298
    %v408 = vpop.f32.mrb[0].mxu0
    %v409 = vadd.f32 0.0, %v408
    %v410 = vpop.f32.mrb[0].mxu0
    %411 = vmatprep.mubr.f32.mxu0 0.0
    %412 = vmatmul.mubr.f32.gmra.mrb[0].mxu0 %v299
    %v413 = vpop.f32.mrb[0].mxu0
    %v414 = vadd.f32 0.0, %v413
    %v415 = vpop.f32.mrb[0].mxu0
    %416 = vmatprep.mubr.f32.mxu0 0.0
    %417 = vmatmul.mubr.f32.gmra.mrb[0].mxu0 %v300
    %v418 = vpop.f32.mrb[0].mxu0
    %v419 = vadd.f32 0.0, %v418
    %v420 = vpop.f32.mrb[0].mxu0
    %421 = vmatprep.mubr.f32.mxu0 0.0
    %422 = vmatmul.mubr.f32.gmra.mrb[0].mxu0 %v301
    %v423 = vpop.f32.mrb[0].mxu0
    %v424 = vadd.f32 0.0, %v423
    %v425 = vpop.f32.mrb[0].mxu0
    %426 = vmatprep.mubr.f32.mxu0 0.0
    %427 = vmatmul.mubr.f32.gmra.mrb[0].mxu0 %v302
    %v428 = vpop.f32.mrb[0].mxu0
    %v429 = vadd.f32 0.0, %v428
    %v430 = vpop.f32.mrb[0].mxu0
    %431 = vmatprep.mubr.f32.mxu0 0.0
    %432 = vmatmul.mubr.f32.gmra.mrb[0].mxu0 %v303
    %v433 = vpop.f32.mrb[0].mxu0
    %v434 = vadd.f32 0.0, %v433
    %v435 = vpop.f32.mrb[0].mxu0
    %436 = vmatprep.mubr.f32.mxu0 0.0
    %437 = vmatmul.mubr.f32.gmra.mrb[0].mxu0 %v304
    %v438 = vpop.f32.mrb[0].mxu0
    %v439 = vadd.f32 0.0, %v438
    %v440 = vpop.f32.mrb[0].mxu0
    %441 = vmatprep.mubr.f32.mxu0 0.0
    %442 = vmatmul.mubr.f32.gmra.mrb[0].mxu0 %v305
    %v443 = vpop.f32.mrb[0].mxu0
    %v444 = vadd.f32 0.0, %v443
    %v445 = vpop.f32.mrb[0].mxu0
    %446 = vmatprep.mubr.f32.mxu0 0.0
    %447 = vmatmul.mubr.f32.gmra.mrb[0].mxu0 %v306
    %v448 = vpop.f32.mrb[0].mxu0
    %v449 = vadd.f32 0.0, %v448
    %v450 = vpop.f32.mrb[0].mxu0
    %451 = vdwg.mxu0
    %v452 = vadd.f32 %v255, %v374
    %v453 = vadd.f32 %v256, %v379
    %v454 = vadd.f32 %v257, %v384
    %v455 = vadd.f32 %v258, %v389
    %v456 = vadd.f32 %v259, %v394
    %v457 = vadd.f32 %v260, %v399
    %v458 = vadd.f32 %v261, %v404
    %v459 = vadd.f32 %v262, %v409
    %v460 = vadd.f32 %v263, %v414
    %v461 = vadd.f32 %v264, %v419
    %v462 = vadd.f32 %v265, %v424
    %v463 = vadd.f32 %v266, %v429
    %v464 = vadd.f32 %v267, %v434
    %v465 = vadd.f32 %v268, %v439
    %v466 = vadd.f32 %v269, %v444
    %v467 = vadd.f32 %v270, %v449
    %468 = vst [vmem:[#allocation2] sm:$0xff] %v452
    %469 = vst [vmem:[#allocation2 + $0x8] sm:$0xff] %v453
    %470 = vst [vmem:[#allocation2 + $0x10] sm:$0xff] %v454
    %471 = vst [vmem:[#allocation2 + $0x18] sm:$0xff] %v455
    %472 = vst [vmem:[#allocation2 + $0x20] sm:$0xff] %v456
    %473 = vst [vmem:[#allocation2 + $0x28] sm:$0xff] %v457
    %474 = vst [vmem:[#allocation2 + $0x30] sm:$0xff] %v458
    %475 = vst [vmem:[#allocation2 + $0x38] sm:$0xff] %v459
    %476 = vst [vmem:[#allocation2 + $0x40] sm:$0xff] %v460
    %477 = vst [vmem:[#allocation2 + $0x48] sm:$0xff] %v461
    %478 = vst [vmem:[#allocation2 + $0x50] sm:$0xff] %v462
    %479 = vst [vmem:[#allocation2 + $0x58] sm:$0xff] %v463
    %480 = vst [vmem:[#allocation2 + $0x60] sm:$0xff] %v464
    %481 = vst [vmem:[#allocation2 + $0x68] sm:$0xff] %v465
    %482 = vst [vmem:[#allocation2 + $0x70] sm:$0xff] %v466
    %483 = vst [vmem:[#allocation2 + $0x78] sm:$0xff] %v467
    // Predicated region
    $region26: #{tpu_custom_call.1} parent=1 // pred_check
      %p484 = pneg %p21
    $region27: #{tpu_custom_call.1} parent=1 // pred_check_branch
      %486 = sbr.rel (%p484) target = $region29
    $region28: #{tpu_custom_call.1} parent=1 // pred_region
      %s487 = smul.u32 0, 128
      %s488 = scalar_lea.vmem %s1, %s487
      %v489 = vld [vmem:[%s488] sm:$0xff]
      %v490 = vld [vmem:[%s488 + $0x8] sm:$0xff]
      %v491 = vld [vmem:[%s488 + $0x10] sm:$0xff]
      %v492 = vld [vmem:[%s488 + $0x18] sm:$0xff]
      %v493 = vld [vmem:[%s488 + $0x20] sm:$0xff]
      %v494 = vld [vmem:[%s488 + $0x28] sm:$0xff]
      %v495 = vld [vmem:[%s488 + $0x30] sm:$0xff]
      %v496 = vld [vmem:[%s488 + $0x38] sm:$0xff]
      %v497 = vld [vmem:[%s488 + $0x40] sm:$0xff]
      %v498 = vld [vmem:[%s488 + $0x48] sm:$0xff]
      %v499 = vld [vmem:[%s488 + $0x50] sm:$0xff]
      %v500 = vld [vmem:[%s488 + $0x58] sm:$0xff]
      %v501 = vld [vmem:[%s488 + $0x60] sm:$0xff]
      %v502 = vld [vmem:[%s488 + $0x68] sm:$0xff]
      %v503 = vld [vmem:[%s488 + $0x70] sm:$0xff]
      %v504 = vld [vmem:[%s488 + $0x78] sm:$0xff]
      %v505 = vld [vmem:[%s3] sm:$0xff]
      %v506 = vld [vmem:[%s3 + $0x8] sm:$0xff]
      %v508 = vsel %vm61, %v489, 0
      %v511 = vsel %vm61, %v490, 0
      %v514 = vsel %vm61, %v491, 0
      %v517 = vsel %vm61, %v492, 0
      %v520 = vsel %vm61, %v493, 0
      %v523 = vsel %vm61, %v494, 0
      %v526 = vsel %vm61, %v495, 0
      %v529 = vsel %vm61, %v496, 0
      %v532 = vsel %vm61, %v497, 0
      %v535 = vsel %vm61, %v498, 0
      %v538 = vsel %vm61, %v499, 0
      %v541 = vsel %vm61, %v500, 0
      %v544 = vsel %vm61, %v501, 0
      %v547 = vsel %vm61, %v502, 0
      %v550 = vsel %vm61, %v503, 0
      %v553 = vsel %vm61, %v504, 0
      %555 = vmatprep.subr.mxu0 0.0
      %556 = vmatpush1.msra.mxu0 %v505
      %557 = vmatprep.subr.mxu0 0.0
      %558 = vmatpush1.msra.mxu0 %v506
      %559 = vmatprep.subr.mxu0 0.0
      %560 = vmatpush1.msra.mxu0 0.0
      %561 = vmatprep.subr.mxu0 0.0
      %562 = vmatpush1.msra.mxu0 0.0
      %563 = vmatprep.subr.mxu0 0.0
      %564 = vmatpush1.msra.mxu0 0.0
      %565 = vmatprep.subr.mxu0 0.0
      %566 = vmatpush1.msra.mxu0 0.0
      %567 = vmatprep.subr.mxu0 0.0
      %568 = vmatpush1.msra.mxu0 0.0
      %569 = vmatprep.subr.mxu0 0.0
      %570 = vmatpush1.msra.mxu0 0.0
      %571 = vmatprep.subr.mxu0 0.0
      %572 = vmatpush1.msra.mxu0 0.0
      %573 = vmatprep.subr.mxu0 0.0
      %574 = vmatpush1.msra.mxu0 0.0
      %575 = vmatprep.subr.mxu0 0.0
      %576 = vmatpush1.msra.mxu0 0.0
      %577 = vmatprep.subr.mxu0 0.0
      %578 = vmatpush1.msra.mxu0 0.0
      %579 = vmatprep.subr.mxu0 0.0
      %580 = vmatpush1.msra.mxu0 0.0
      %581 = vmatprep.subr.mxu0 0.0
      %582 = vmatpush1.msra.mxu0 0.0
      %583 = vmatprep.subr.mxu0 0.0
      %584 = vmatpush1.msra.mxu0 0.0
      %585 = vmatprep.subr.mxu0 0.0
      %586 = vmatpush1.msra.mxu0 0.0
      %587 = vmatprep.subr.mxu0 0.0
      %588 = vmatpush1.msra.mxu0 0.0
      %589 = vmatprep.subr.mxu0 0.0
      %590 = vmatpush1.msra.mxu0 0.0
      %591 = vmatprep.subr.mxu0 0.0
      %592 = vmatpush1.msra.mxu0 0.0
      %593 = vmatprep.subr.mxu0 0.0
      %594 = vmatpush1.msra.mxu0 0.0
      %595 = vmatprep.subr.mxu0 0.0
      %596 = vmatpush1.msra.mxu0 0.0
      %597 = vmatprep.subr.mxu0 0.0
      %598 = vmatpush1.msra.mxu0 0.0
      %599 = vmatprep.subr.mxu0 0.0
      %600 = vmatpush1.msra.mxu0 0.0
      %601 = vmatprep.subr.mxu0 0.0
      %602 = vmatpush1.msra.mxu0 0.0
      %603 = vmatprep.subr.mxu0 0.0
      %604 = vmatpush1.msra.mxu0 0.0
      %605 = vmatprep.subr.mxu0 0.0
      %606 = vmatpush1.msra.mxu0 0.0
      %607 = vmatprep.subr.mxu0 0.0
      %608 = vmatpush1.msra.mxu0 0.0
      %609 = vmatprep.subr.mxu0 0.0
      %610 = vmatpush1.msra.mxu0 0.0
      %611 = vmatprep.subr.mxu0 0.0
      %612 = vmatpush1.msra.mxu0 0.0
      %613 = vmatprep.subr.mxu0 0.0
      %614 = vmatpush1.msra.mxu0 0.0
      %615 = vmatprep.subr.mxu0 0.0
      %616 = vmatpush1.msra.mxu0 0.0
      %617 = vmatprep.subr.mxu0 0.0
      %618 = vmatpush1.msra.mxu0 0.0
      %619 = vmatprep.mubr.f32.mxu0 0.0
      %620 = vmatmul.mubr.f32.gmra.mrb[0].mxu0 %v508
      %v621 = vpop.f32.mrb[0].mxu0
      %v622 = vadd.f32 0.0, %v621
      %v623 = vpop.f32.mrb[0].mxu0
      %624 = vmatprep.mubr.f32.mxu0 0.0
      %625 = vmatmul.mubr.f32.gmra.mrb[0].mxu0 %v511
      %v626 = vpop.f32.mrb[0].mxu0
      %v627 = vadd.f32 0.0, %v626
      %v628 = vpop.f32.mrb[0].mxu0
      %629 = vmatprep.mubr.f32.mxu0 0.0
      %630 = vmatmul.mubr.f32.gmra.mrb[0].mxu0 %v514
      %v631 = vpop.f32.mrb[0].mxu0
      %v632 = vadd.f32 0.0, %v631
      %v633 = vpop.f32.mrb[0].mxu0
      %634 = vmatprep.mubr.f32.mxu0 0.0
      %635 = vmatmul.mubr.f32.gmra.mrb[0].mxu0 %v517
      %v636 = vpop.f32.mrb[0].mxu0
      %v637 = vadd.f32 0.0, %v636
      %v638 = vpop.f32.mrb[0].mxu0
      %639 = vmatprep.mubr.f32.mxu0 0.0
      %640 = vmatmul.mubr.f32.gmra.mrb[0].mxu0 %v520
      %v641 = vpop.f32.mrb[0].mxu0
      %v642 = vadd.f32 0.0, %v641
      %v643 = vpop.f32.mrb[0].mxu0
      %644 = vmatprep.mubr.f32.mxu0 0.0
      %645 = vmatmul.mubr.f32.gmra.mrb[0].mxu0 %v523
      %v646 = vpop.f32.mrb[0].mxu0
      %v647 = vadd.f32 0.0, %v646
      %v648 = vpop.f32.mrb[0].mxu0
      %649 = vmatprep.mubr.f32.mxu0 0.0
      %650 = vmatmul.mubr.f32.gmra.mrb[0].mxu0 %v526
      %v651 = vpop.f32.mrb[0].mxu0
      %v652 = vadd.f32 0.0, %v651
      %v653 = vpop.f32.mrb[0].mxu0
      %654 = vmatprep.mubr.f32.mxu0 0.0
      %655 = vmatmul.mubr.f32.gmra.mrb[0].mxu0 %v529
      %v656 = vpop.f32.mrb[0].mxu0
      %v657 = vadd.f32 0.0, %v656
      %v658 = vpop.f32.mrb[0].mxu0
      %659 = vmatprep.mubr.f32.mxu0 0.0
      %660 = vmatmul.mubr.f32.gmra.mrb[0].mxu0 %v532
      %v661 = vpop.f32.mrb[0].mxu0
      %v662 = vadd.f32 0.0, %v661
      %v663 = vpop.f32.mrb[0].mxu0
      %664 = vmatprep.mubr.f32.mxu0 0.0
      %665 = vmatmul.mubr.f32.gmra.mrb[0].mxu0 %v535
      %v666 = vpop.f32.mrb[0].mxu0
      %v667 = vadd.f32 0.0, %v666
      %v668 = vpop.f32.mrb[0].mxu0
      %669 = vmatprep.mubr.f32.mxu0 0.0
      %670 = vmatmul.mubr.f32.gmra.mrb[0].mxu0 %v538
      %v671 = vpop.f32.mrb[0].mxu0
      %v672 = vadd.f32 0.0, %v671
      %v673 = vpop.f32.mrb[0].mxu0
      %674 = vmatprep.mubr.f32.mxu0 0.0
      %675 = vmatmul.mubr.f32.gmra.mrb[0].mxu0 %v541
      %v676 = vpop.f32.mrb[0].mxu0
      %v677 = vadd.f32 0.0, %v676
      %v678 = vpop.f32.mrb[0].mxu0
      %679 = vmatprep.mubr.f32.mxu0 0.0
      %680 = vmatmul.mubr.f32.gmra.mrb[0].mxu0 %v544
      %v681 = vpop.f32.mrb[0].mxu0
      %v682 = vadd.f32 0.0, %v681
      %v683 = vpop.f32.mrb[0].mxu0
      %684 = vmatprep.mubr.f32.mxu0 0.0
      %685 = vmatmul.mubr.f32.gmra.mrb[0].mxu0 %v547
      %v686 = vpop.f32.mrb[0].mxu0
      %v687 = vadd.f32 0.0, %v686
      %v688 = vpop.f32.mrb[0].mxu0
      %689 = vmatprep.mubr.f32.mxu0 0.0
      %690 = vmatmul.mubr.f32.gmra.mrb[0].mxu0 %v550
      %v691 = vpop.f32.mrb[0].mxu0
      %v692 = vadd.f32 0.0, %v691
      %v693 = vpop.f32.mrb[0].mxu0
      %694 = vmatprep.mubr.f32.mxu0 0.0
      %695 = vmatmul.mubr.f32.gmra.mrb[0].mxu0 %v553
      %v696 = vpop.f32.mrb[0].mxu0
      %v697 = vadd.f32 0.0, %v696
      %v698 = vpop.f32.mrb[0].mxu0
      %699 = vdwg.mxu0
      %v700 = vld [vmem:[%s0] sm:$0xff]
      %v701 = vld [vmem:[%s0 + $0x8] sm:$0xff]
      %v702 = vld [vmem:[%s0 + $0x10] sm:$0xff]
      %v703 = vld [vmem:[%s0 + $0x18] sm:$0xff]
      %v704 = vld [vmem:[%s0 + $0x20] sm:$0xff]
      %v705 = vld [vmem:[%s0 + $0x28] sm:$0xff]
      %v706 = vld [vmem:[%s0 + $0x30] sm:$0xff]
      %v707 = vld [vmem:[%s0 + $0x38] sm:$0xff]
      %v708 = vld [vmem:[%s0 + $0x40] sm:$0xff]
      %v709 = vld [vmem:[%s0 + $0x48] sm:$0xff]
      %v710 = vld [vmem:[%s0 + $0x50] sm:$0xff]
      %v711 = vld [vmem:[%s0 + $0x58] sm:$0xff]
      %v712 = vld [vmem:[%s0 + $0x60] sm:$0xff]
      %v713 = vld [vmem:[%s0 + $0x68] sm:$0xff]
      %v714 = vld [vmem:[%s0 + $0x70] sm:$0xff]
      %v715 = vld [vmem:[%s0 + $0x78] sm:$0xff]
      %717 = vset.pattern.permute.xlu0 0
      %718 = vperm.xlu0 %717, %v700
      %v719 = vpop.permute.xlu0 %718
      %722 = vset.pattern.permute.xlu0 0
      %723 = vperm.xlu0 %722, %v701
      %v724 = vpop.permute.xlu0 %723
      %727 = vset.pattern.permute.xlu0 0
      %728 = vperm.xlu0 %727, %v702
      %v729 = vpop.permute.xlu0 %728
      %732 = vset.pattern.permute.xlu0 0
      %733 = vperm.xlu0 %732, %v703
      %v734 = vpop.permute.xlu0 %733
      %737 = vset.pattern.permute.xlu0 0
      %738 = vperm.xlu0 %737, %v704
      %v739 = vpop.permute.xlu0 %738
      %742 = vset.pattern.permute.xlu0 0
      %743 = vperm.xlu0 %742, %v705
      %v744 = vpop.permute.xlu0 %743
      %747 = vset.pattern.permute.xlu0 0
      %748 = vperm.xlu0 %747, %v706
      %v749 = vpop.permute.xlu0 %748
      %752 = vset.pattern.permute.xlu0 0
      %753 = vperm.xlu0 %752, %v707
      %v754 = vpop.permute.xlu0 %753
      %757 = vset.pattern.permute.xlu0 0
      %758 = vperm.xlu0 %757, %v708
      %v759 = vpop.permute.xlu0 %758
      %762 = vset.pattern.permute.xlu0 0
      %763 = vperm.xlu0 %762, %v709
      %v764 = vpop.permute.xlu0 %763
      %767 = vset.pattern.permute.xlu0 0
      %768 = vperm.xlu0 %767, %v710
      %v769 = vpop.permute.xlu0 %768
      %772 = vset.pattern.permute.xlu0 0
      %773 = vperm.xlu0 %772, %v711
      %v774 = vpop.permute.xlu0 %773
      %777 = vset.pattern.permute.xlu0 0
      %778 = vperm.xlu0 %777, %v712
      %v779 = vpop.permute.xlu0 %778
      %782 = vset.pattern.permute.xlu0 0
      %783 = vperm.xlu0 %782, %v713
      %v784 = vpop.permute.xlu0 %783
      %787 = vset.pattern.permute.xlu0 0
      %788 = vperm.xlu0 %787, %v714
      %v789 = vpop.permute.xlu0 %788
      %792 = vset.pattern.permute.xlu0 0
      %793 = vperm.xlu0 %792, %v715
      %v794 = vpop.permute.xlu0 %793
      %v796 = vmul.f32 %v719, %v622
      %v797 = vmul.f32 %v724, %v627
      %v798 = vmul.f32 %v729, %v632
      %v799 = vmul.f32 %v734, %v637
      %v800 = vmul.f32 %v739, %v642
      %v801 = vmul.f32 %v744, %v647
      %v802 = vmul.f32 %v749, %v652
      %v803 = vmul.f32 %v754, %v657
      %v804 = vmul.f32 %v759, %v662
      %v805 = vmul.f32 %v764, %v667
      %v806 = vmul.f32 %v769, %v672
      %v807 = vmul.f32 %v774, %v677
      %v808 = vmul.f32 %v779, %v682
      %v809 = vmul.f32 %v784, %v687
      %v810 = vmul.f32 %v789, %v692
      %v811 = vmul.f32 %v794, %v697
      %v812 = vld [vmem:[#allocation2] sm:$0xff]
      %v813 = vld [vmem:[#allocation2 + $0x8] sm:$0xff]
      %v814 = vld [vmem:[#allocation2 + $0x10] sm:$0xff]
      %v815 = vld [vmem:[#allocation2 + $0x18] sm:$0xff]
      %v816 = vld [vmem:[#allocation2 + $0x20] sm:$0xff]
      %v817 = vld [vmem:[#allocation2 + $0x28] sm:$0xff]
      %v818 = vld [vmem:[#allocation2 + $0x30] sm:$0xff]
      %v819 = vld [vmem:[#allocation2 + $0x38] sm:$0xff]
      %v820 = vld [vmem:[#allocation2 + $0x40] sm:$0xff]
      %v821 = vld [vmem:[#allocation2 + $0x48] sm:$0xff]
      %v822 = vld [vmem:[#allocation2 + $0x50] sm:$0xff]
      %v823 = vld [vmem:[#allocation2 + $0x58] sm:$0xff]
      %v824 = vld [vmem:[#allocation2 + $0x60] sm:$0xff]
      %v825 = vld [vmem:[#allocation2 + $0x68] sm:$0xff]
      %v826 = vld [vmem:[#allocation2 + $0x70] sm:$0xff]
      %v827 = vld [vmem:[#allocation2 + $0x78] sm:$0xff]
      %v828 = vsub.f32 %v796, %v812
      %v829 = vsub.f32 %v797, %v813
      %v830 = vsub.f32 %v798, %v814
      %v831 = vsub.f32 %v799, %v815
      %v832 = vsub.f32 %v800, %v816
      %v833 = vsub.f32 %v801, %v817
      %v834 = vsub.f32 %v802, %v818
      %v835 = vsub.f32 %v803, %v819
      %v836 = vsub.f32 %v804, %v820
      %v837 = vsub.f32 %v805, %v821
      %v838 = vsub.f32 %v806, %v822
      %v839 = vsub.f32 %v807, %v823
      %v840 = vsub.f32 %v808, %v824
      %v841 = vsub.f32 %v809, %v825
      %v842 = vsub.f32 %v810, %v826
      %v843 = vsub.f32 %v811, %v827
      %v844 = vmul.f32 %v828, 0.03125
      %v845 = vmul.f32 %v829, 0.03125
      %v846 = vmul.f32 %v830, 0.03125
      %v847 = vmul.f32 %v831, 0.03125
      %v848 = vmul.f32 %v832, 0.03125
      %v849 = vmul.f32 %v833, 0.03125
      %v850 = vmul.f32 %v834, 0.03125
      %v851 = vmul.f32 %v835, 0.03125
      %v852 = vmul.f32 %v836, 0.03125
      %v853 = vmul.f32 %v837, 0.03125
      %v854 = vmul.f32 %v838, 0.03125
      %v855 = vmul.f32 %v839, 0.03125
      %v856 = vmul.f32 %v840, 0.03125
      %v857 = vmul.f32 %v841, 0.03125
      %v858 = vmul.f32 %v842, 0.03125
      %v859 = vmul.f32 %v843, 0.03125
      %v860 = vld [vmem:[%s4] sm:$0x1]
      %v862 = vlaneseq
      %v863 = vshrl.u32 %v862, 7
      %v864 = vsub.s32 0, %v863
      %v865 = vrot.slane %v860, %v864
      %v867 = vadd.f32 %v844, %v865
      %v868 = vadd.f32 %v845, %v865
      %v869 = vadd.f32 %v846, %v865
      %v870 = vadd.f32 %v847, %v865
      %v871 = vadd.f32 %v848, %v865
      %v872 = vadd.f32 %v849, %v865
      %v873 = vadd.f32 %v850, %v865
      %v874 = vadd.f32 %v851, %v865
      %v875 = vadd.f32 %v852, %v865
      %v876 = vadd.f32 %v853, %v865
      %v877 = vadd.f32 %v854, %v865
      %v878 = vadd.f32 %v855, %v865
      %v879 = vadd.f32 %v856, %v865
      %v880 = vadd.f32 %v857, %v865
      %v881 = vadd.f32 %v858, %v865
      %v882 = vadd.f32 %v859, %v865
      %883 = vst [vmem:[#allocation2] sm:$0xff] %v867
      %884 = vst [vmem:[#allocation2 + $0x8] sm:$0xff] %v868
      %885 = vst [vmem:[#allocation2 + $0x10] sm:$0xff] %v869
      %886 = vst [vmem:[#allocation2 + $0x18] sm:$0xff] %v870
      %887 = vst [vmem:[#allocation2 + $0x20] sm:$0xff] %v871
      %888 = vst [vmem:[#allocation2 + $0x28] sm:$0xff] %v872
      %889 = vst [vmem:[#allocation2 + $0x30] sm:$0xff] %v873
      %890 = vst [vmem:[#allocation2 + $0x38] sm:$0xff] %v874
      %891 = vst [vmem:[#allocation2 + $0x40] sm:$0xff] %v875
      %892 = vst [vmem:[#allocation2 + $0x48] sm:$0xff] %v876
      %893 = vst [vmem:[#allocation2 + $0x50] sm:$0xff] %v877
      %894 = vst [vmem:[#allocation2 + $0x58] sm:$0xff] %v878
      %895 = vst [vmem:[#allocation2 + $0x60] sm:$0xff] %v879
      %896 = vst [vmem:[#allocation2 + $0x68] sm:$0xff] %v880
      %897 = vst [vmem:[#allocation2 + $0x70] sm:$0xff] %v881
      %898 = vst [vmem:[#allocation2 + $0x78] sm:$0xff] %v882
    $region29: #{tpu_custom_call.1} parent=1 // pred_fallthru
      _
    // Predicated region
    $region30: #{tpu_custom_call.1} parent=1 // pred_check
      _
    $region31: #{tpu_custom_call.1} parent=1 // pred_check_branch
      %900 = sbr.rel (0) target = $region33
    $region32: #{tpu_custom_call.1} parent=1 // pred_region
      %s902 = ssub.s32 2048, 2048
      %903 = vsyncadd [#allocation3], %s902
      %s904 = sshll.u32 [#allocation2], 4
      %s905 = int_to_ptr.vmem [resolvable:$true] %s904
      %910 = dma.vmem_to_hbm [thread:$0]  %s905, 2048, %s5, [#allocation3], 128, 128, 8
    $region33: #{tpu_custom_call.1} parent=1 // pred_fallthru
      _
    // Predicated region
    $region34: #{tpu_custom_call.1} parent=1 // pred_check
      _
    $region35: #{tpu_custom_call.1} parent=1 // pred_check_branch
      %912 = sbr.rel (0) target = $region37
    $region36: #{tpu_custom_call.1} parent=1 // pred_region
      %913 = dma.done [#allocation3], 2048
    $region37: #{tpu_custom_call.1} parent=1 // pred_fallthru
      _
    %914 = vsyncpa [#allocation3], 1

</llo_original>
